<compile_context>
chip_gen: v6e
topology: v6e:2x2x1
jax: 0.10.0
libtpu: 0.0.40
codegen_flags: <defaults>
</compile_context>

<pallas_src>
import jax
import jax.numpy as jnp
from jax.experimental import pallas as pl
from jax.experimental.pallas import tpu as pltpu


def _round_up(x, m):
    return ((x + m - 1) // m) * m


def decoder_kernel(x_ref, w_ref, shift_ref, o1_ref, o2_ref):
    """One batch-tile of the fused Decoder forward.

    x_ref     : (TB, T)        latent composition tile (bf16)
    w_ref     : (T, 2*Gp)      [beta^T * bn1_scale | fc^T * bn2_scale]  (bf16)
    shift_ref : (1, 2*Gp)      [bn1_shift | bn2_shift]                  (f32)
    o1_ref    : (TB, Gp)       softmax(BN1(x @ beta^T)) over gene axis
    o2_ref    : (TB, Gp)       BN2(x @ fc^T)
    """
    Gp = o1_ref.shape[-1]

    # Single MXU matmul for both branches (f32 accumulation).
    h = jnp.dot(x_ref[...], w_ref[...], preferred_element_type=jnp.float32)
    y = h + shift_ref[...]                       # folded-BN shift (scale already in W)

    # Store the fc/BN2 branch first (shortens the live range of y[:, Gp:]
    # while the softmax intermediates are live).
    o2_ref[...] = y[:, Gp:].astype(o2_ref.dtype)

    # ---- softmax over the gene (lane) axis ----
    y1 = y[:, :Gp]
    m = jnp.max(y1, axis=-1, keepdims=True)
    e = jnp.exp(y1 - m)
    denom = jnp.sum(e, axis=-1, keepdims=True)
    inv = 1.0 / denom                            # exact (tb,1) divide: rows sum to ~1
    o1_ref[...] = (e * inv).astype(o1_ref.dtype)


def decoder_forward(x, w_beta, w_fc, bn1, bn2, *, tb=512, eps=1e-5,
                    compute_dtype=jnp.bfloat16, out_dtype=jnp.bfloat16):
    """x: (B, T) f32; w_beta/w_fc: (G, T) f32 (PyTorch nn.Linear layout, bias=False);
    bn1/bn2: dicts with gamma, beta, mean, var (each (G,)). Eval-mode forward."""
    B, T = x.shape
    G = w_beta.shape[0]

    # --- fold eval-mode BatchNorm (running stats) into per-gene scale / shift ---
    def fold(bn):
        scale = bn["gamma"] / jnp.sqrt(bn["var"] + eps)        # (G,)
        shift = bn["beta"] - bn["mean"] * scale                # (G,)
        return scale, shift

    s1, b1 = fold(bn1)
    s2, b2 = fold(bn2)

    # --- pad gene axis to a lane multiple (128): keeps the fused-result column
    #     split and the output stores lane-aligned (no masked vst / relayouts) ---
    G_pad = _round_up(G, 128)
    if G_pad != G:
        pad = G_pad - G
        w_beta = jnp.pad(w_beta, ((0, pad), (0, 0)))
        w_fc = jnp.pad(w_fc, ((0, pad), (0, 0)))
        s1 = jnp.pad(s1, (0, pad))
        s2 = jnp.pad(s2, (0, pad))
        # padded softmax logits get a huge negative shift -> exp() == 0, so the
        # padded genes never contribute to the row normalization
        b1 = jnp.pad(b1, (0, pad), constant_values=-1e30)
        b2 = jnp.pad(b2, (0, pad))

    # (T, G_pad) transposed weights with BN scale folded in, concatenated along
    # genes -> one (T, 2*G_pad) MXU operand, cast to bf16.
    w_fused = jnp.concatenate(
        [w_beta.T * s1[None, :], w_fc.T * s2[None, :]], axis=1
    ).astype(compute_dtype)                                    # (T, 2*G_pad)
    shift = jnp.concatenate([b1, b2]).reshape(1, 2 * G_pad).astype(jnp.float32)
    x_c = x.astype(compute_dtype)

    # --- batch tiling ---
    tb = max(8, min(_round_up(tb, 8), _round_up(B, 8)))
    if B >= 16:
        # guarantee >= 2 grid steps so both v7x TensorCores can be used
        tb = min(tb, _round_up(pl.cdiv(B, 2), 8))

    cbytes = jnp.dtype(compute_dtype).itemsize
    obytes = jnp.dtype(out_dtype).itemsize

    def vmem_bytes(t):
        return (2 * t * T * cbytes                 # x tile, double-buffered
                + T * 2 * G_pad * cbytes           # fused weights, Buffered(1)
                + 2 * G_pad * 4                    # shift, Buffered(1)
                + 2 * 2 * t * G_pad * obytes       # two output tiles, double-buffered
                + 3 * t * 2 * G_pad * 4)           # f32 intermediates (h, y, e)

    VMEM_BUDGET = 40 << 20                         # headroom on v7x's 64 MiB / TC
    while tb > 8 and vmem_bytes(tb) > VMEM_BUDGET:
        tb -= 8

    grid = (pl.cdiv(B, tb),)
    vmem_limit = int(min(56 << 20, max(32 << 20, int(1.25 * vmem_bytes(tb)))))

    # Note: if B % tb != 0 the last tile's padded rows compute garbage softmax
    # values, but Pallas never writes those out-of-bounds rows back to HBM.
    out_shapes = (
        jax.ShapeDtypeStruct((B, G_pad), out_dtype),
        jax.ShapeDtypeStruct((B, G_pad), out_dtype),
    )

    o1, o2 = pl.pallas_call(
        decoder_kernel,
        out_shape=out_shapes,
        grid_spec=pltpu.PrefetchScalarGridSpec(
            num_scalar_prefetch=0,
            grid=grid,
            in_specs=[
                pl.BlockSpec((tb, T), lambda i: (i, 0)),        # x tile
                pl.BlockSpec((T, 2 * G_pad), lambda i: (0, 0),  # fused weights
                             pipeline_mode=pl.Buffered(1)),     #   (grid-invariant)
                pl.BlockSpec((1, 2 * G_pad), lambda i: (0, 0),  # fused BN shift
                             pipeline_mode=pl.Buffered(1)),
            ],
            out_specs=[
                pl.BlockSpec((tb, G_pad), lambda i: (i, 0)),
                pl.BlockSpec((tb, G_pad), lambda i: (i, 0)),
            ],
        ),
        compiler_params=pltpu.CompilerParams(
            dimension_semantics=("parallel",),
            vmem_limit_bytes=vmem_limit,
        ),
    )(x_c, w_fused, shift)

    if G_pad != G:
        o1 = o1[:, :G]
        o2 = o2[:, :G]
    return o1, o2


def _reference(x, w_beta, w_fc, bn1, bn2, eps=1e-5):
    def bn(h, p):
        return (h - p["mean"]) / jnp.sqrt(p["var"] + eps) * p["gamma"] + p["beta"]
    y1 = bn(x @ w_beta.T, bn1)
    o1 = jax.nn.softmax(y1, axis=1)
    o2 = bn(x @ w_fc.T, bn2)
    return o1, o2


if __name__ == "__main__":
    # Small shapes implied by the module: latent_composition is (batch, num_topics).
    batch, num_topics, num_genes = 48, 32, 256

    key = jax.random.PRNGKey(0)
    kx, kb, kf, kg1, kb1, km1, kv1, kg2, kb2, km2, kv2 = jax.random.split(key, 11)

    x = jax.random.normal(kx, (batch, num_topics), dtype=jnp.float32)

    # nn.Linear(num_topics, num_genes, bias=False): weight is (num_genes, num_topics).
    w_beta = jax.random.normal(kb, (num_genes, num_topics), dtype=jnp.float32) * 0.1
    w_fc = jax.random.normal(kf, (num_genes, num_topics), dtype=jnp.float32) * 0.1

    # Deterministic BatchNorm1d parameters + running stats (eval mode).
    bn1 = {
        "gamma": 1.0 + 0.1 * jax.random.normal(kg1, (num_genes,), dtype=jnp.float32),
        "beta": 0.1 * jax.random.normal(kb1, (num_genes,), dtype=jnp.float32),
        "mean": 0.05 * jax.random.normal(km1, (num_genes,), dtype=jnp.float32),
        "var": jnp.abs(1.0 + 0.1 * jax.random.normal(kv1, (num_genes,), dtype=jnp.float32)),
    }
    bn2 = {
        "gamma": 1.0 + 0.1 * jax.random.normal(kg2, (num_genes,), dtype=jnp.float32),
        "beta": 0.1 * jax.random.normal(kb2, (num_genes,), dtype=jnp.float32),
        "mean": 0.05 * jax.random.normal(km2, (num_genes,), dtype=jnp.float32),
        "var": jnp.abs(1.0 + 0.1 * jax.random.normal(kv2, (num_genes,), dtype=jnp.float32)),
    }

    # TODO(synk): Dropout is identity in eval mode; training-mode dropout / batch-stat
    # BatchNorm updates are intentionally not reproduced here.

    # Default tb=512 gets clamped to 24 here (>=2 grid steps for batch=48).
    o1, o2 = decoder_forward(x, w_beta, w_fc, bn1, bn2)
    jax.block_until_ready((o1, o2))

    r1, r2 = _reference(x, w_beta, w_fc, bn1, bn2)
    o1f = o1.astype(jnp.float32)
    o2f = o2.astype(jnp.float32)

    # Tolerances account for bf16 matmul inputs and bf16 outputs.
    assert jnp.allclose(o1f, r1, atol=5e-3, rtol=5e-2), "softmax branch mismatch"
    assert jnp.allclose(o2f, r2, atol=3e-2, rtol=3e-2), "fc/bn2 branch mismatch"
    assert jnp.allclose(jnp.sum(o1f, axis=1), 1.0, atol=1e-2), "softmax rows must sum to ~1"

    print("KERNEL_OK")
</pallas_src>

<mosaic_0001>
module attributes {stable_mosaic.version = 11 : i64} {
  func.func @decoder_kernel(%arg0: i32, %arg1: memref<24x32xbf16, #tpu.memory_space<vmem>>, %arg2: memref<32x512xbf16, #tpu.memory_space<vmem>>, %arg3: memref<1x512xf32, #tpu.memory_space<vmem>>, %arg4: memref<24x256xbf16, #tpu.memory_space<vmem>>, %arg5: memref<24x256xbf16, #tpu.memory_space<vmem>>) attributes {dimension_semantics = [#tpu.dimension_semantics<parallel>], iteration_bounds = array<i64: 2>, scalar_prefetch = 0 : i64, scratch_operands = 0 : i64, tpu.core_type = #tpu.core_type<tc>, window_params = [{transform_indices = @transform_0, window_bounds = array<i64: 24, 32>}, {pipeline_mode = #tpu.pipeline_mode<synchronous>, transform_indices = @transform_1, window_bounds = array<i64: 32, 512>}, {pipeline_mode = #tpu.pipeline_mode<synchronous>, transform_indices = @transform_2, window_bounds = array<i64: 1, 512>}, {transform_indices = @transform_3, window_bounds = array<i64: 24, 256>}, {transform_indices = @transform_4, window_bounds = array<i64: 24, 256>}]} {
    %c0 = arith.constant 0 : index
    %c0_0 = arith.constant 0 : index
    %0 = vector.load %arg1[%c0, %c0_0] : memref<24x32xbf16, #tpu.memory_space<vmem>>, vector<24x32xbf16>
    %c0_1 = arith.constant 0 : index
    %c0_2 = arith.constant 0 : index
    %1 = vector.load %arg2[%c0_1, %c0_2] : memref<32x512xbf16, #tpu.memory_space<vmem>>, vector<32x512xbf16>
    %cst = arith.constant dense<0.000000e+00> : vector<24x512xf32>
    %2 = tpu.matmul %0, %1, %cst {dimension_numbers = #tpu.dot_dimension_numbers<[1], [0], [0], [1], [0, 0, 1, 1], [], []>} : vector<24x32xbf16>, vector<32x512xbf16>, vector<24x512xf32> -> vector<24x512xf32>
    %c0_3 = arith.constant 0 : index
    %c0_4 = arith.constant 0 : index
    %3 = vector.load %arg3[%c0_3, %c0_4] : memref<1x512xf32, #tpu.memory_space<vmem>>, vector<1x512xf32>
    %4 = vector.broadcast %3 : vector<1x512xf32> to vector<24x512xf32>
    %5 = arith.addf %2, %4 : vector<24x512xf32>
    %6 = vector.extract_strided_slice %5 {offsets = [0, 256], sizes = [24, 256], strides = [1, 1]} : vector<24x512xf32> to vector<24x256xf32>
    %7 = arith.truncf %6 : vector<24x256xf32> to vector<24x256xbf16>
    %c0_5 = arith.constant 0 : index
    %c0_6 = arith.constant 0 : index
    %8 = vector.load %arg5[%c0_5, %c0_6] : memref<24x256xbf16, #tpu.memory_space<vmem>>, vector<24x256xbf16>
    tpu.vector_store %arg5[%c0_5, %c0_6], %7 {strides = array<i32>} : memref<24x256xbf16, #tpu.memory_space<vmem>>, vector<24x256xbf16>,
    %9 = vector.extract_strided_slice %5 {offsets = [0, 0], sizes = [24, 256], strides = [1, 1]} : vector<24x512xf32> to vector<24x256xf32>
    %cst_7 = arith.constant dense<0xFF800000> : vector<24xf32>
    %10 = vector.multi_reduction <maximumf>, %9, %cst_7 [1] : vector<24x256xf32> to vector<24xf32>
    %11 = vector.shape_cast %10 : vector<24xf32> to vector<24x1xf32>
    %12 = vector.broadcast %11 : vector<24x1xf32> to vector<24x256xf32>
    %13 = arith.subf %9, %12 : vector<24x256xf32>
    %14 = math.exp %13 : vector<24x256xf32>
    %cst_8 = arith.constant dense<0.000000e+00> : vector<24xf32>
    %15 = vector.multi_reduction <add>, %14, %cst_8 [1] : vector<24x256xf32> to vector<24xf32>
    %16 = vector.shape_cast %15 : vector<24xf32> to vector<24x1xf32>
    %cst_9 = arith.constant 1.000000e+00 : f32
    %17 = vector.broadcast %cst_9 : f32 to vector<24x1xf32>
    %18 = arith.divf %17, %16 : vector<24x1xf32>
    %19 = vector.broadcast %18 : vector<24x1xf32> to vector<24x256xf32>
    %20 = arith.mulf %14, %19 : vector<24x256xf32>
    %21 = arith.truncf %20 : vector<24x256xf32> to vector<24x256xbf16>
    %c0_10 = arith.constant 0 : index
    %c0_11 = arith.constant 0 : index
    %22 = vector.load %arg4[%c0_10, %c0_11] : memref<24x256xbf16, #tpu.memory_space<vmem>>, vector<24x256xbf16>
    tpu.vector_store %arg4[%c0_10, %c0_11], %21 {strides = array<i32>} : memref<24x256xbf16, #tpu.memory_space<vmem>>, vector<24x256xbf16>,
    return
  }
  func.func @transform_0(%arg0: i32) -> (i32, i32) {
    %c0_i32 = arith.constant 0 : i32
    %c0_i32_0 = arith.constant 0 : i32
    return %arg0, %c0_i32 : i32, i32
  }
  func.func @transform_1(%arg0: i32) -> (i32, i32) {
    %c0_i32 = arith.constant 0 : i32
    %c0_i32_0 = arith.constant 0 : i32
    %c0_i32_1 = arith.constant 0 : i32
    return %c0_i32, %c0_i32_0 : i32, i32
  }
  func.func @transform_2(%arg0: i32) -> (i32, i32) {
    %c0_i32 = arith.constant 0 : i32
    %c0_i32_0 = arith.constant 0 : i32
    %c0_i32_1 = arith.constant 0 : i32
    return %c0_i32, %c0_i32_0 : i32, i32
  }
  func.func @transform_3(%arg0: i32) -> (i32, i32) {
    %c0_i32 = arith.constant 0 : i32
    %c0_i32_0 = arith.constant 0 : i32
    return %arg0, %c0_i32 : i32, i32
  }
  func.func @transform_4(%arg0: i32) -> (i32, i32) {
    %c0_i32 = arith.constant 0 : i32
    %c0_i32_0 = arith.constant 0 : i32
    return %arg0, %c0_i32 : i32, i32
  }
}

</mosaic_0001>

<llo_original>
// kernel: tpu_custom_call.1
$region0: #{tpu_custom_call.1}
  #allocation0 [shape = 'u32[]', space=smem, size = 0x4, offset = 0x4, fixed_abs, tag = 'smem constant byte address 0x4 - core index']
  #allocation1 [shape = 'u32[144,128]{1,0:T(1,128)}', space=vmem, size = 0x12000, scoped, tag = 'internal scratch']
  %s0 = inlined_call_operand.vmem [shape: bf16[48,32], index: 0, kind: input, shape index: {}]
  %s1 = inlined_call_operand.hbm [shape: bf16[32,512], index: 1, kind: input, shape index: {}]
  %s2 = inlined_call_operand.vmem [shape: f32[1,512], index: 2, kind: input, shape index: {}]
  %s3 = inlined_call_operand.hbm [shape: bf16[48,256], index: 3, kind: output, shape index: {0}]
  %s4 = inlined_call_operand.hbm [shape: bf16[48,256], index: 4, kind: output, shape index: {1}]
  %5 = xla_tuple %s3, %s4
  %s6 = sld [smem:[#allocation0]]
  $region57: #{tpu_custom_call.1} parent=0
    _
  %s8 = ssub.s32 1, %s6
  %s9 = scalar_select 0, %s8, %s6
  $region1: #{tpu_custom_call.1} parent=0
    #allocation2 [shape = 'u8[32768]{0}', space=vmem, size = 0x8000, scoped, tag = 'input window, operand 1, single buffered']
    #allocation3 [shape = 's32[2]{0}', space=sflag, size = 0x8, scoped, tag = 'scoped memory for tpu_custom_call.1']
    #allocation4 [shape = 's32[2]{0}', space=sflag, size = 0x8, scoped, tag = 'scoped memory for tpu_custom_call.1']
    #allocation5 [shape = 'u8[24576]{0}', space=vmem, size = 0x6000, scoped, tag = 'output window, operand 0']
    #allocation6 [shape = 'u8[24576]{0}', space=vmem, size = 0x6000, scoped, tag = 'output window, operand 1']
    #allocation7 [shape = 's32[2]{0}', space=sflag, size = 0x8, scoped, tag = 'scoped memory for tpu_custom_call.1']
    %10 = vsyncpa [#allocation3], 0
    %11 = vsyncpa [#allocation4], 0
    %s12 = scalar_lea.sflag [#allocation4], 1
    %13 = vsyncpa %s12, 0
    %14 = vsyncpa [#allocation7], 0
    %s15 = scalar_lea.sflag [#allocation7], 1
    %16 = vsyncpa %s15, 0
    loop: start=0, step=1, limit=4
    $region2: #{tpu_custom_call.1} parent=1 // loop_pre_header
      _
    $region3: #{tpu_custom_call.1} parent=1 // loop_header
      %s18 = sphi 0, %s22
      %p19 = scmp.ge.s32.totalorder %s18, 4
      %s28 = sphi 0, %s30
      %s31 = sphi 0, %s28
      %s32 = sphi 0, %s31
      %s48 = sphi 0, %s32
      %s52 = sphi 0, %s52
      %s54 = sphi 0, %s52
      %s55 = sphi 0, %s54
      %s69 = sphi 0, %s55
      %s73 = sphi 0, %s73
      %s75 = sphi 0, %s73
      %s76 = sphi 0, %s75
      %s90 = sphi 0, %s76
      %s96 = sphi 0, %s98
      %s99 = sphi 0, %s96
      %s100 = sphi 0, %s99
      %s116 = sphi 0, %s100
      %s122 = sphi 0, %s124
      %s125 = sphi 0, %s122
      %s126 = sphi 0, %s125
      %s142 = sphi 0, %s126
    $region4: #{tpu_custom_call.1} parent=1 // loop_header_branch
      %21 = sbr.rel (%p19) target = $region8
    $region5: #{tpu_custom_call.1} parent=1 // loop_body
      %s23 = ssub.s32 %s18, 1
      %s24 = ssub.s32 %s18, 2
      %s25 = sadd.s32 %s18, 1
      %s26 = ssub.s32 %s18, %s25
      %p27 = scmp.eq.s32.totalorder %s26, 0
      %s29 = sadd.s32 %s28, 1
      %s30 = scalar_select %p27, %s28, %s29
      %p33 = pneg %p27
      %p34 = scmp.eq.s32.totalorder %s18, 1
      %p35 = por %p33, %p34
      %p36 = scmp.ne.s32.totalorder %s28, %s31
      %p37 = scmp.eq.s32.totalorder %s18, 0
      %p38 = por %p36, %p37
      %p39 = scmp.ne.s32.totalorder %s28, %s31
      %p40 = scmp.eq.s32.totalorder %s23, 1
      %p41 = por %p39, %p40
      %p42 = scmp.ne.s32.totalorder %s31, %s32
      %p43 = scmp.eq.s32.totalorder %s23, 0
      %p44 = por %p42, %p43
      %p45 = scmp.ne.s32.totalorder %s31, %s32
      %p46 = scmp.eq.s32.totalorder %s24, 1
      %p47 = por %p45, %p46
      %p49 = scmp.ne.s32.totalorder %s32, %s48
      %p50 = scmp.eq.s32.totalorder %s24, 0
      %p51 = por %p49, %p50
      %s53 = sadd.s32 %s52, 1
      %p56 = scmp.eq.s32.totalorder %s18, 1
      %p57 = scmp.ne.s32.totalorder %s52, %s54
      %p58 = scmp.eq.s32.totalorder %s18, 0
      %p59 = por %p57, %p58
      %p60 = scmp.ne.s32.totalorder %s52, %s54
      %p61 = scmp.eq.s32.totalorder %s23, 1
      %p62 = por %p60, %p61
      %p63 = scmp.ne.s32.totalorder %s54, %s55
      %p64 = scmp.eq.s32.totalorder %s23, 0
      %p65 = por %p63, %p64
      %p66 = scmp.ne.s32.totalorder %s54, %s55
      %p67 = scmp.eq.s32.totalorder %s24, 1
      %p68 = por %p66, %p67
      %p70 = scmp.ne.s32.totalorder %s55, %s69
      %p71 = scmp.eq.s32.totalorder %s24, 0
      %p72 = por %p70, %p71
      %s74 = sadd.s32 %s73, 1
      %p77 = scmp.eq.s32.totalorder %s18, 1
      %p78 = scmp.ne.s32.totalorder %s73, %s75
      %p79 = scmp.eq.s32.totalorder %s18, 0
      %p80 = por %p78, %p79
      %p81 = scmp.ne.s32.totalorder %s73, %s75
      %p82 = scmp.eq.s32.totalorder %s23, 1
      %p83 = por %p81, %p82
      %p84 = scmp.ne.s32.totalorder %s75, %s76
      %p85 = scmp.eq.s32.totalorder %s23, 0
      %p86 = por %p84, %p85
      %p87 = scmp.ne.s32.totalorder %s75, %s76
      %p88 = scmp.eq.s32.totalorder %s24, 1
      %p89 = por %p87, %p88
      %p91 = scmp.ne.s32.totalorder %s76, %s90
      %p92 = scmp.eq.s32.totalorder %s24, 0
      %p93 = por %p91, %p92
      %s94 = ssub.s32 %s18, %s25
      %p95 = scmp.eq.s32.totalorder %s94, 0
      %s97 = sadd.s32 %s96, 1
      %s98 = scalar_select %p95, %s96, %s97
      %p101 = pneg %p95
      %p102 = scmp.eq.s32.totalorder %s18, 1
      %p103 = por %p101, %p102
      %p104 = scmp.ne.s32.totalorder %s96, %s99
      %p105 = scmp.eq.s32.totalorder %s18, 0
      %p106 = por %p104, %p105
      %p107 = scmp.ne.s32.totalorder %s96, %s99
      %p108 = scmp.eq.s32.totalorder %s23, 1
      %p109 = por %p107, %p108
      %p110 = scmp.ne.s32.totalorder %s99, %s100
      %p111 = scmp.eq.s32.totalorder %s23, 0
      %p112 = por %p110, %p111
      %p113 = scmp.ne.s32.totalorder %s99, %s100
      %p114 = scmp.eq.s32.totalorder %s24, 1
      %p115 = por %p113, %p114
      %p117 = scmp.ne.s32.totalorder %s100, %s116
      %p118 = scmp.eq.s32.totalorder %s24, 0
      %p119 = por %p117, %p118
      %s120 = ssub.s32 %s18, %s25
      %p121 = scmp.eq.s32.totalorder %s120, 0
      %s123 = sadd.s32 %s122, 1
      %s124 = scalar_select %p121, %s122, %s123
      %p127 = pneg %p121
      %p128 = scmp.eq.s32.totalorder %s18, 1
      %p129 = por %p127, %p128
      %p130 = scmp.ne.s32.totalorder %s122, %s125
      %p131 = scmp.eq.s32.totalorder %s18, 0
      %p132 = por %p130, %p131
      %p133 = scmp.ne.s32.totalorder %s122, %s125
      %p134 = scmp.eq.s32.totalorder %s23, 1
      %p135 = por %p133, %p134
      %p136 = scmp.ne.s32.totalorder %s125, %s126
      %p137 = scmp.eq.s32.totalorder %s23, 0
      %p138 = por %p136, %p137
      %p139 = scmp.ne.s32.totalorder %s125, %s126
      %p140 = scmp.eq.s32.totalorder %s24, 1
      %p141 = por %p139, %p140
      %p143 = scmp.ne.s32.totalorder %s126, %s142
      %p144 = scmp.eq.s32.totalorder %s24, 0
      %p145 = por %p143, %p144
      %p146 = scmp.le.s32.totalorder 1, %s18
      %p147 = scmp.lt.s32.totalorder %s18, 3
      %p148 = pnand %p146, %p147
      %p149 = pneg %p148
      // Predicated region
      $region9: #{tpu_custom_call.1} parent=5 // pred_check
        _
      $region10: #{tpu_custom_call.1} parent=5 // pred_check_branch
        %151 = sbr.rel (%p148) target = $region12
      $region11: #{tpu_custom_call.1} parent=5 // pred_region
        %s152 = ssub.s32 %s18, 1
        // Predicated region
        $region13: #{tpu_custom_call.1} parent=11 // pred_check
          %p153 = pneg %p65
        $region14: #{tpu_custom_call.1} parent=11 // pred_check_branch
          %155 = sbr.rel (%p153) target = $region16
        $region15: #{tpu_custom_call.1} parent=11 // pred_region
          %s157 = ssub.s32 1024, 1024
          %158 = vsyncadd [#allocation3], %s157
          %s159 = sshll.u32 [#allocation2], 4
          %s160 = int_to_ptr.vmem [resolvable:$true] %s159
          %165 = dma.hbm_to_vmem [thread:$0]  %s1, 1024, %s160, [#allocation3], 256, 256, 16
        $region16: #{tpu_custom_call.1} parent=11 // pred_fallthru
          _
        // Predicated region
        $region17: #{tpu_custom_call.1} parent=11 // pred_check
          %p166 = pneg %p86
        $region18: #{tpu_custom_call.1} parent=11 // pred_check_branch
          %168 = sbr.rel (%p166) target = $region20
        $region19: #{tpu_custom_call.1} parent=11 // pred_region
          _
        $region20: #{tpu_custom_call.1} parent=11 // pred_fallthru
          _
      $region12: #{tpu_custom_call.1} parent=5 // pred_fallthru
        _
      %p169 = scmp.lt.s32.totalorder %s18, 2
      // Predicated region
      $region21: #{tpu_custom_call.1} parent=5 // pred_check
        %p170 = pneg %p169
      $region22: #{tpu_custom_call.1} parent=5 // pred_check_branch
        %172 = sbr.rel (%p170) target = $region24
      $region23: #{tpu_custom_call.1} parent=5 // pred_region
        // Predicated region
        $region25: #{tpu_custom_call.1} parent=23 // pred_check
          %p173 = pneg %p38
        $region26: #{tpu_custom_call.1} parent=23 // pred_check_branch
          %175 = sbr.rel (%p173) target = $region28
        $region27: #{tpu_custom_call.1} parent=23 // pred_region
          %s176 = smul.u32 3, %s18
          %p177 = scmp.lt.s32.totalorder %s176, 5
          %s178 = scalar_select %p177, %s176, 5
          %s179 = smul.addr %s178, 4
          %s180 = scalar_lea.vmem %s0, %s179
          %s181 = smul.u32 3, %s18
        $region28: #{tpu_custom_call.1} parent=23 // pred_fallthru
          _
      $region24: #{tpu_custom_call.1} parent=5 // pred_fallthru
        _
      %p182 = scmp.le.s32.totalorder 1, %s18
      %p183 = scmp.lt.s32.totalorder %s18, 3
      %p184 = pnand %p182, %p183
      %p185 = pneg %p184
      // Predicated region
      $region29: #{tpu_custom_call.1} parent=5 // pred_check
        _
      $region30: #{tpu_custom_call.1} parent=5 // pred_check_branch
        %187 = sbr.rel (%p184) target = $region32
      $region31: #{tpu_custom_call.1} parent=5 // pred_region
        %s188 = ssub.s32 %s18, 1
        // Predicated region
        $region33: #{tpu_custom_call.1} parent=31 // pred_check
          %p189 = pneg %p65
        $region34: #{tpu_custom_call.1} parent=31 // pred_check_branch
          %191 = sbr.rel (%p189) target = $region36
        $region35: #{tpu_custom_call.1} parent=31 // pred_region
          %192 = dma.done [#allocation3], 1024
        $region36: #{tpu_custom_call.1} parent=31 // pred_fallthru
          _
        %s193 = smul.u32 3, %s23
        %p194 = scmp.lt.s32.totalorder %s193, 5
        %s195 = scalar_select %p194, %s193, 5
        %s196 = smul.addr %s195, 4
        %s197 = scalar_lea.vmem %s0, %s196
        %p198 = pneg %p44
        %p199 = pneg %p41
        %p200 = pneg %p65
        %p201 = pneg %p62
        %p202 = pneg %p86
        %p203 = pneg %p83
        %p204 = pneg %p112
        %p205 = pneg %p109
        %s206 = sand.u32 %s99, 1
        %s207 = scalar_lea.sflag [#allocation4], %s206
        %s208 = sand.u32 %s99, 1
        %s209 = smul.addr %s208, 24
        %s210 = scalar_lea.vmem [#allocation5], %s209
        %p211 = pneg %p138
        %p212 = pneg %p135
        %s213 = sand.u32 %s125, 1
        %s214 = scalar_lea.sflag [#allocation7], %s213
        %s215 = sand.u32 %s125, 1
        %s216 = smul.addr %s215, 24
        %s217 = scalar_lea.vmem [#allocation6], %s216
        %s218 = smul.u32 3, %s23
        %p219 = scmp.lt.s32.totalorder %s218, 5
        %s220 = scalar_select %p219, %s218, 5
        %s221 = smul.addr %s220, 4
        %s222 = scalar_lea.vmem %s0, %s221
        %s223 = smul.u32 3, %s23
        %s224 = smul.u32 3, %s23
        %s225 = smul.u32 3, %s23
        %v227 = vld [vmem:[%s222] sm:$0xf]
        %v228 = vld [vmem:[%s222 + $0x4] sm:$0xf]
        %v229 = vld [vmem:[%s222 + $0x8] sm:$0xf]
        %v230 = vld [vmem:[#allocation2] sm:$0xff]
        %v231 = vld [vmem:[#allocation2 + $0x8] sm:$0xff]
        %v232 = vld [vmem:[#allocation2 + $0x10] sm:$0xff]
        %v233 = vld [vmem:[#allocation2 + $0x18] sm:$0xff]
        %v234 = vld [vmem:[#allocation2 + $0x20] sm:$0xff]
        %v235 = vld [vmem:[#allocation2 + $0x28] sm:$0xff]
        %v236 = vld [vmem:[#allocation2 + $0x30] sm:$0xff]
        %v237 = vld [vmem:[#allocation2 + $0x38] sm:$0xff]
        %v238 = vld [vmem:[%s2] sm:$0xf]
        %v240 = vlaneseq
        %v241 = vshrl.u32 %v240, 7
        %v242 = vsub.s32 0, %v241
        %v243 = vrot.slane %v238, %v242
        %v244 = vlaneseq
        %v245 = vshrl.u32 %v244, 7
        %v246 = vsub.s32 1, %v245
        %v247 = vrot.slane %v238, %v246
        %v248 = vlaneseq
        %v249 = vshrl.u32 %v248, 7
        %v250 = vsub.s32 2, %v249
        %v251 = vrot.slane %v238, %v250
        %v252 = vlaneseq
        %v253 = vshrl.u32 %v252, 7
        %v254 = vsub.s32 3, %v253
        %v255 = vrot.slane %v238, %v254
        %v263 = vunpack.c.l.b16 %v227
        %v264 = vunpack.c.l.b16 %v228
        %v265 = vunpack.c.l.b16 %v229
        %v266 = vpack.c.b16 %v264, %v263
        %v267 = vpack.c.b16 %v265, %v265
        %v276 = vunpack.c.l.b16 %v230
        %v277 = vunpack.c.h.b16 %v230
        %v278 = vunpack.c.l.b16 %v231
        %v279 = vunpack.c.h.b16 %v231
        %v280 = vunpack.c.l.b16 %v232
        %v281 = vunpack.c.h.b16 %v232
        %v282 = vunpack.c.l.b16 %v233
        %v283 = vunpack.c.h.b16 %v233
        %v284 = vunpack.c.l.b16 %v234
        %v285 = vunpack.c.h.b16 %v234
        %v286 = vunpack.c.l.b16 %v235
        %v287 = vunpack.c.h.b16 %v235
        %v288 = vunpack.c.l.b16 %v236
        %v289 = vunpack.c.h.b16 %v236
        %v290 = vunpack.c.l.b16 %v237
        %v291 = vunpack.c.h.b16 %v237
        %v292 = vpack.c.b16 %v280, %v276
        %v293 = vpack.c.b16 %v281, %v277
        %v294 = vpack.c.b16 %v282, %v278
        %v295 = vpack.c.b16 %v283, %v279
        %v296 = vpack.c.b16 %v288, %v284
        %v297 = vpack.c.b16 %v289, %v285
        %v298 = vpack.c.b16 %v290, %v286
        %v299 = vpack.c.b16 %v291, %v287
        %vm308 = vcmask 261120
        %v310 = vsel %vm308, %v266, 0
        %v313 = vsel %vm308, %v267, 0
        %315 = vmatprep.subr.bf16.mxu0 0
        %316 = vmatpush1.bf16.msra.mxu0 0
        %317 = vmatprep.subr.bf16.mxu0 0
        %318 = vmatpush1.bf16.msra.mxu0 0
        %319 = vmatprep.subr.bf16.mxu0 0
        %320 = vmatpush1.bf16.msra.mxu0 0
        %321 = vmatprep.subr.bf16.mxu0 0
        %322 = vmatpush1.bf16.msra.mxu0 0
        %323 = vmatprep.subr.bf16.mxu0 0
        %324 = vmatpush1.bf16.msra.mxu0 0
        %325 = vmatprep.subr.bf16.mxu0 0
        %326 = vmatpush1.bf16.msra.mxu0 0
        %327 = vmatprep.subr.bf16.mxu0 %v297
        %328 = vmatpush1.bf16.msra.mxu0 %v296
        %329 = vmatprep.subr.bf16.mxu0 %v293
        %330 = vmatpush1.bf16.msra.mxu0 %v292
        %331 = vmatprep.subr.bf16.mxu0 0
        %332 = vmatpush2.bf16.msra.mxu0 0
        %333 = vmatprep.subr.bf16.mxu0 0
        %334 = vmatpush2.bf16.msra.mxu0 0
        %335 = vmatprep.subr.bf16.mxu0 0
        %336 = vmatpush2.bf16.msra.mxu0 0
        %337 = vmatprep.subr.bf16.mxu0 0
        %338 = vmatpush2.bf16.msra.mxu0 0
        %339 = vmatprep.subr.bf16.mxu0 0
        %340 = vmatpush2.bf16.msra.mxu0 0
        %341 = vmatprep.subr.bf16.mxu0 0
        %342 = vmatpush2.bf16.msra.mxu0 0
        %343 = vmatprep.subr.bf16.mxu0 0
        %344 = vmatpush2.bf16.msra.mxu0 0
        %345 = vmatprep.subr.bf16.mxu0 0
        %346 = vmatpush2.bf16.msra.mxu0 0
        %347 = vmatprep.mubr.bf16.mxu0 0
        %348 = vmatmul.mubr.bf16.gmra.mxu0 %v310
        %v349 = vpop.f32.mrf.mxu0
        %v350 = vadd.f32 %v243, %v349
        %v351 = vpop.f32.mrf.mxu0
        %v352 = vadd.f32 %v247, %v351
        %v353 = vpop.f32.mrf.mxu0
        %v354 = vadd.f32 %v243, %v353
        %v355 = vpop.f32.mrf.mxu0
        %v356 = vadd.f32 %v247, %v355
        %357 = vmatprep.mubr.bf16.mxu0 0
        %358 = vmatmul.mubr.bf16.gmra.mxu0 %v313
        %v359 = vpop.f32.mrf.mxu0
        %v360 = vadd.f32 %v243, %v359
        %v361 = vpop.f32.mrf.mxu0
        %v362 = vadd.f32 %v247, %v361
        %v363 = vpop.f32.mrf.mxu0
        %v364 = vpop.f32.mrf.mxu0
        %365 = vdwg.mxu0
        %366 = vmatprep.subr.bf16.mxu0 0
        %367 = vmatpush1.bf16.msra.mxu0 0
        %368 = vmatprep.subr.bf16.mxu0 0
        %369 = vmatpush1.bf16.msra.mxu0 0
        %370 = vmatprep.subr.bf16.mxu0 0
        %371 = vmatpush1.bf16.msra.mxu0 0
        %372 = vmatprep.subr.bf16.mxu0 0
        %373 = vmatpush1.bf16.msra.mxu0 0
        %374 = vmatprep.subr.bf16.mxu0 0
        %375 = vmatpush1.bf16.msra.mxu0 0
        %376 = vmatprep.subr.bf16.mxu0 0
        %377 = vmatpush1.bf16.msra.mxu0 0
        %378 = vmatprep.subr.bf16.mxu0 %v299
        %379 = vmatpush1.bf16.msra.mxu0 %v298
        %380 = vmatprep.subr.bf16.mxu0 %v295
        %381 = vmatpush1.bf16.msra.mxu0 %v294
        %382 = vmatprep.subr.bf16.mxu0 0
        %383 = vmatpush2.bf16.msra.mxu0 0
        %384 = vmatprep.subr.bf16.mxu0 0
        %385 = vmatpush2.bf16.msra.mxu0 0
        %386 = vmatprep.subr.bf16.mxu0 0
        %387 = vmatpush2.bf16.msra.mxu0 0
        %388 = vmatprep.subr.bf16.mxu0 0
        %389 = vmatpush2.bf16.msra.mxu0 0
        %390 = vmatprep.subr.bf16.mxu0 0
        %391 = vmatpush2.bf16.msra.mxu0 0
        %392 = vmatprep.subr.bf16.mxu0 0
        %393 = vmatpush2.bf16.msra.mxu0 0
        %394 = vmatprep.subr.bf16.mxu0 0
        %395 = vmatpush2.bf16.msra.mxu0 0
        %396 = vmatprep.subr.bf16.mxu0 0
        %397 = vmatpush2.bf16.msra.mxu0 0
        %398 = vmatprep.mubr.bf16.mxu0 0
        %399 = vmatmul.mubr.bf16.gmra.mxu0 %v310
        %v400 = vpop.f32.mrf.mxu0
        %v401 = vadd.f32 %v251, %v400
        %v402 = vpop.f32.mrf.mxu0
        %v403 = vadd.f32 %v255, %v402
        %v404 = vpop.f32.mrf.mxu0
        %v405 = vadd.f32 %v251, %v404
        %v406 = vpop.f32.mrf.mxu0
        %v407 = vadd.f32 %v255, %v406
        %408 = vmatprep.mubr.bf16.mxu0 0
        %409 = vmatmul.mubr.bf16.gmra.mxu0 %v313
        %v410 = vpop.f32.mrf.mxu0
        %v411 = vadd.f32 %v251, %v410
        %v412 = vpop.f32.mrf.mxu0
        %v413 = vadd.f32 %v255, %v412
        %v414 = vpop.f32.mrf.mxu0
        %v415 = vpop.f32.mrf.mxu0
        %416 = vdwg.mxu0
        %v417 = vpack.c.bf16 %v405, %v401
        %v418 = vpack.c.bf16 %v407, %v403
        %v419 = vpack.c.bf16 %v411, %v411
        %v420 = vpack.c.bf16 %v413, %v413
        %v425 = vunpack.c.l.b16 %v417
        %v426 = vunpack.c.l.b16 %v418
        %v427 = vunpack.c.h.b16 %v417
        %v428 = vunpack.c.h.b16 %v418
        %v429 = vunpack.c.l.b16 %v419
        %v430 = vunpack.c.l.b16 %v420
        %v431 = vpack.c.b16 %v426, %v425
        %v432 = vpack.c.b16 %v428, %v427
        %v433 = vpack.c.b16 %v430, %v429
        %437 = vst [vmem:[%s217] sm:$0xff] %v431
        %438 = vst [vmem:[%s217 + $0x8] sm:$0xff] %v432
        %439 = vst [vmem:[%s217 + $0x10] sm:$0xff] %v433
        %v440 = vmax.f32 %v350, %v352
        %441 = vmax.xlane.f32.xlu0 %v440
        %v442 = vpop.xlane.xlu0 %441
        %v443 = vmax.f32 %v354, %v356
        %444 = vmax.xlane.f32.xlu0 %v443
        %v445 = vpop.xlane.xlu0 %444
        %v446 = vmax.f32 %v360, %v362
        %447 = vmax.xlane.f32.xlu0 %v446
        %v448 = vpop.xlane.xlu0 %447
        %v449 = vsub.f32 %v350, %v442
        %v450 = vsub.f32 %v352, %v442
        %v451 = vsub.f32 %v354, %v445
        %v452 = vsub.f32 %v356, %v445
        %v453 = vsub.f32 %v360, %v448
        %v454 = vsub.f32 %v362, %v448
        %v455 = vmul.f32 %v449, 1.442695
        %v456 = vpow.pop %v455
        %v457 = vmul.f32 %v450, 1.442695
        %v458 = vpow.pop %v457
        %v459 = vmul.f32 %v451, 1.442695
        %v460 = vpow.pop %v459
        %v461 = vmul.f32 %v452, 1.442695
        %v462 = vpow.pop %v461
        %v463 = vmul.f32 %v453, 1.442695
        %v464 = vpow.pop %v463
        %v465 = vmul.f32 %v454, 1.442695
        %v466 = vpow.pop %v465
        %v467 = vadd.f32 %v456, %v458
        %468 = vadd.xlane.f32.xlu0 %v467
        %v469 = vpop.xlane.xlu0 %468
        %v470 = vadd.f32 %v460, %v462
        %471 = vadd.xlane.f32.xlu0 %v470
        %v472 = vpop.xlane.xlu0 %471
        %v473 = vadd.f32 %v464, %v466
        %474 = vadd.xlane.f32.xlu0 %v473
        %v475 = vpop.xlane.xlu0 %474
        %v476 = vrcp.pop %v469
        %v477 = vmul.f32 1.0, %v476
        %v478 = vrcp.pop %v472
        %v479 = vmul.f32 1.0, %v478
        %v480 = vrcp.pop %v475
        %v481 = vmul.f32 1.0, %v480
        %v482 = vmul.f32 %v456, %v477
        %v483 = vmul.f32 %v458, %v477
        %v484 = vmul.f32 %v460, %v479
        %v485 = vmul.f32 %v462, %v479
        %v486 = vmul.f32 %v464, %v481
        %v487 = vmul.f32 %v466, %v481
        %v488 = vpack.c.bf16 %v484, %v482
        %v489 = vpack.c.bf16 %v485, %v483
        %v490 = vpack.c.bf16 %v486, %v486
        %v491 = vpack.c.bf16 %v487, %v487
        %v496 = vunpack.c.l.b16 %v488
        %v497 = vunpack.c.l.b16 %v489
        %v498 = vunpack.c.h.b16 %v488
        %v499 = vunpack.c.h.b16 %v489
        %v500 = vunpack.c.l.b16 %v490
        %v501 = vunpack.c.l.b16 %v491
        %v502 = vpack.c.b16 %v497, %v496
        %v503 = vpack.c.b16 %v499, %v498
        %v504 = vpack.c.b16 %v501, %v500
        %508 = vst [vmem:[%s210] sm:$0xff] %v502
        %509 = vst [vmem:[%s210 + $0x8] sm:$0xff] %v503
        %510 = vst [vmem:[%s210 + $0x10] sm:$0xff] %v504
        %s511 = sand.u32 %s99, 1
        %s512 = scalar_lea.sflag [#allocation4], %s511
        %s513 = sand.u32 %s99, 1
        %s514 = smul.addr %s513, 24
        %s515 = scalar_lea.vmem [#allocation5], %s514
        %s516 = sand.u32 %s125, 1
        %s517 = scalar_lea.sflag [#allocation7], %s516
        %s518 = sand.u32 %s125, 1
        %s519 = smul.addr %s518, 24
        %s520 = scalar_lea.vmem [#allocation6], %s519
        // Predicated region
        $region37: #{tpu_custom_call.1} parent=31 // pred_check
          %p521 = pneg %p109
        $region38: #{tpu_custom_call.1} parent=31 // pred_check_branch
          %523 = sbr.rel (%p521) target = $region40
        $region39: #{tpu_custom_call.1} parent=31 // pred_region
          %s524 = smul.u32 3, %s23
          %s526 = ssub.s32 384, 384
          %527 = vsyncadd %s512, %s526
          %s528 = smul.addr %s524, 2
          %s529 = smul.addr %s528, 64
          %s530 = scalar_lea.hbm %s3, %s529
          %s531 = sshll.u32 %s515, 4
          %s532 = int_to_ptr.vmem [resolvable:$true] %s531
          %537 = dma.vmem_to_hbm [thread:$0]  %s532, 384, %s530, %s512, 128, 128, 8
        $region40: #{tpu_custom_call.1} parent=31 // pred_fallthru
          _
        // Predicated region
        $region41: #{tpu_custom_call.1} parent=31 // pred_check
          %p538 = pneg %p135
        $region42: #{tpu_custom_call.1} parent=31 // pred_check_branch
          %540 = sbr.rel (%p538) target = $region44
        $region43: #{tpu_custom_call.1} parent=31 // pred_region
          %s541 = smul.u32 3, %s23
          %s543 = ssub.s32 384, 384
          %544 = vsyncadd %s517, %s543
          %s545 = smul.addr %s541, 2
          %s546 = smul.addr %s545, 64
          %s547 = scalar_lea.hbm %s4, %s546
          %s548 = sshll.u32 %s520, 4
          %s549 = int_to_ptr.vmem [resolvable:$true] %s548
          %554 = dma.vmem_to_hbm [thread:$0]  %s549, 384, %s547, %s517, 128, 128, 8
        $region44: #{tpu_custom_call.1} parent=31 // pred_fallthru
          _
      $region32: #{tpu_custom_call.1} parent=5 // pred_fallthru
        _
      %p555 = scmp.le.s32.totalorder 2, %s18
      // Predicated region
      $region45: #{tpu_custom_call.1} parent=5 // pred_check
        %p556 = pneg %p555
      $region46: #{tpu_custom_call.1} parent=5 // pred_check_branch
        %558 = sbr.rel (%p556) target = $region48
      $region47: #{tpu_custom_call.1} parent=5 // pred_region
        %s559 = ssub.s32 %s18, 2
        // Predicated region
        $region49: #{tpu_custom_call.1} parent=47 // pred_check
          %p560 = pneg %p115
        $region50: #{tpu_custom_call.1} parent=47 // pred_check_branch
          %562 = sbr.rel (%p560) target = $region52
        $region51: #{tpu_custom_call.1} parent=47 // pred_region
          %s563 = sand.u32 %s100, 1
          %s564 = scalar_lea.sflag [#allocation4], %s563
          %s565 = sand.u32 %s100, 1
          %s566 = smul.addr %s565, 24
          %s567 = scalar_lea.vmem [#allocation5], %s566
          %568 = dma.done %s564, 384
        $region52: #{tpu_custom_call.1} parent=47 // pred_fallthru
          _
        // Predicated region
        $region53: #{tpu_custom_call.1} parent=47 // pred_check
          %p569 = pneg %p141
        $region54: #{tpu_custom_call.1} parent=47 // pred_check_branch
          %571 = sbr.rel (%p569) target = $region56
        $region55: #{tpu_custom_call.1} parent=47 // pred_region
          %s572 = sand.u32 %s126, 1
          %s573 = scalar_lea.sflag [#allocation7], %s572
          %s574 = sand.u32 %s126, 1
          %s575 = smul.addr %s574, 24
          %s576 = scalar_lea.vmem [#allocation6], %s575
          %577 = dma.done %s573, 384
        $region56: #{tpu_custom_call.1} parent=47 // pred_fallthru
          _
      $region48: #{tpu_custom_call.1} parent=5 // pred_fallthru
        _
    $region6: #{tpu_custom_call.1} parent=1 // loop_footer
      %s22 = sadd.s32 1, %s18
    $region7: #{tpu_custom_call.1} parent=1 // loop_footer_branch
      %17 = sbr.rel target = $region3
    $region8: #{tpu_custom_call.1} parent=1 // loop_exit
      _
    %578 = vsyncpa [#allocation3], 1
    %s579 = scalar_lea.sflag [#allocation3], 1
    %580 = vsyncpa %s579, 1
    %581 = vsyncpa [#allocation4], 1
    %s582 = scalar_lea.sflag [#allocation4], 1
    %583 = vsyncpa %s582, 1
    %584 = vsyncpa [#allocation7], 1
    %s585 = scalar_lea.sflag [#allocation7], 1
    %586 = vsyncpa %s585, 1

</llo_original>
